<compile_context>
chip_gen: v7x
topology: tpu7x:2x2x1
jax: 0.10.0
libtpu: 0.0.40
codegen_flags: <defaults>
</compile_context>

<pallas_src>
import jax
import jax.numpy as jnp
from jax.experimental import pallas as pl
from jax.experimental.pallas import tpu as pltpu

_MiB = 1024 * 1024


def _make_fusion_kernel(num_views):
    def kernel(nw_ref, *refs):
        # nw_ref:            (num_views,) f32 in SMEM — softmax-normalized weights.
        # refs[:num_views]:  per-view (TB, TD) VMEM tiles.
        # refs[num_views]:   (TB, TD) fused-output VMEM tile.
        view_refs = refs[:num_views]
        out_ref = refs[num_views]
        # Unrolled FMA chain; each view tile is loaded inside the loop so at most a
        # couple of tiles are live at once and vld overlaps the VPU multiplies.
        acc = view_refs[0][...].astype(jnp.float32) * nw_ref[0]
        for v in range(1, num_views):
            acc = acc + view_refs[v][...].astype(jnp.float32) * nw_ref[v]
        out_ref[...] = acc.astype(out_ref.dtype)

    return kernel


def _lane_dense_shape(batch, feat):
    """Purely elementwise op: present a lane-dense slab to the kernel.

    If the feature dim is already a wide multiple of 128, keep the natural 2D shape.
    Otherwise flatten and re-split into (total // TD, TD) with TD a large multiple of
    128, so stores are unmasked full-lane vst with no remainder column tiles.
    """
    if feat % 128 == 0 and feat >= 512:
        return batch, feat
    total = batch * feat
    for td in (4096, 2048, 1024, 512, 256, 128):
        if total >= td and total % td == 0:
            return total // td, td
    return batch, feat  # no lane-dense factorization; fall back to native shape


def _vmem_plan():
    """Derive (per-step tile budget, vmem_limit_bytes) from the chip's VMEM capacity."""
    cap = None
    try:
        cap = getattr(pltpu.get_tpu_info(), "vmem_capacity_bytes", None)
    except Exception:
        cap = None
    if not cap:
        cap = 64 * _MiB  # conservative: exact for v7x, under-estimates v5e/v6e (128 MiB)
    vmem_limit = max(32 * _MiB, min(cap - 16 * _MiB, 64 * _MiB))
    tile_budget = max(12 * _MiB, vmem_limit - 8 * _MiB)  # headroom for compiler scratch
    return tile_budget, vmem_limit


def _pick_tiles(rows, cols, num_views, in_itemsize, out_itemsize, budget_bytes):
    # Sublane packing for the view dtype: f32 -> 8, bf16 -> 16, int8/fp8 -> 32.
    sub = max(8, 32 // max(1, in_itemsize))

    # Feature tile: full feature extent when it fits; otherwise the largest multiple
    # of 128 <= 2048 that divides cols (no remainder column tiles), else 2048.
    if cols <= 2048:
        td = cols
    else:
        td = 2048
        for cand in range(2048, 127, -128):
            if cols % cand == 0:
                td = cand
                break

    def row_tile(td_):
        # num_views input tiles + 1 output tile per step, each double-buffered.
        per_row = (num_views * in_itemsize + out_itemsize) * td_ * 2
        t = budget_bytes // per_row
        if t >= rows:
            return rows
        return max(sub, (t // sub) * sub)

    tb = row_tile(td)
    # For large num_views, shrink td before letting tb collapse: keeps each of the
    # V+1 DMA streams long and leaves enough grid steps for core sharding.
    while tb < min(rows, 4 * sub) and td > 512 and (td // 2) % 128 == 0:
        td //= 2
        tb = row_tile(td)
    return tb, td, sub


def weight_fusion(weights, *views):
    """weights: (num_views,) float; each view: (batch, feature_dim), all same shape/dtype."""
    num_views = weights.shape[0]
    assert len(views) == num_views, "need one view per weight"
    batch, feat = views[0].shape
    view_dtype = views[0].dtype
    for v in views:
        assert v.shape == (batch, feat) and v.dtype == view_dtype

    # Softmax over num_views scalars, computed wrapper-side (O(V) scalar work); the
    # normalized weights reach the kernel via SMEM.
    normalized_weights = jax.nn.softmax(weights.astype(jnp.float32), axis=0)

    # Match PyTorch type promotion: f32 weights * view -> promoted dtype.
    out_dtype = jnp.result_type(normalized_weights.dtype, view_dtype)

    # Lane-dense presentation of the elementwise problem.
    rows, cols = _lane_dense_shape(batch, feat)
    if (rows, cols) != (batch, feat):
        kviews = [v.reshape(rows, cols) for v in views]
    else:
        kviews = list(views)

    in_itemsize = jnp.dtype(view_dtype).itemsize
    out_itemsize = jnp.dtype(out_dtype).itemsize
    tile_budget, vmem_limit = _vmem_plan()
    tb, td, sub = _pick_tiles(rows, cols, num_views, in_itemsize, out_itemsize, tile_budget)

    # Guarantee >= 2 grid steps when the problem is non-trivial so v7x's two
    # TensorCores both get work (harmless single-TC on v5e/v6e).
    if pl.cdiv(rows, tb) * pl.cdiv(cols, td) == 1:
        if rows * cols * in_itemsize > 4 * _MiB and rows >= 2 * sub:
            tb = max(sub, ((rows // 2) // sub) * sub)

    grid = (pl.cdiv(rows, tb), pl.cdiv(cols, td))

    view_spec = pl.BlockSpec((tb, td), lambda i, j: (i, j))
    in_specs = [pl.BlockSpec(memory_space=pltpu.SMEM)]   # normalized weights (V,)
    in_specs += [view_spec] * num_views

    fused = pl.pallas_call(
        _make_fusion_kernel(num_views),
        out_shape=jax.ShapeDtypeStruct((rows, cols), out_dtype),
        grid=grid,
        in_specs=in_specs,
        out_specs=pl.BlockSpec((tb, td), lambda i, j: (i, j)),
        compiler_params=pltpu.CompilerParams(
            dimension_semantics=("parallel", "parallel"),
            vmem_limit_bytes=vmem_limit,
        ),
    )(normalized_weights, *kviews)

    fused = fused.reshape(batch, feat)
    return fused, normalized_weights


if __name__ == "__main__":
    num_views = 3
    batch = 8
    feature_dim = 128

    # Deterministic parameter init, matching nn.Parameter(ones(num_views)/num_views).
    weights = jnp.ones((num_views,), dtype=jnp.float32) / num_views

    key = jax.random.PRNGKey(0)
    keys = jax.random.split(key, num_views)
    views = [jax.random.normal(k, (batch, feature_dim), dtype=jnp.float32) for k in keys]

    fused, nw = weight_fusion(weights, *views)
    jax.block_until_ready((fused, nw))

    # Pure-JAX reference check.
    nw_ref = jax.nn.softmax(weights, axis=0)
    fused_ref = sum(w * v for w, v in zip(nw_ref, views))
    assert fused.shape == (batch, feature_dim)
    assert jnp.allclose(nw, nw_ref, atol=1e-6), "normalized weights mismatch"
    assert jnp.allclose(fused, fused_ref, atol=1e-5), "fused feature mismatch"

    print("KERNEL_OK")
</pallas_src>

<mosaic_0001>
module attributes {stable_mosaic.version = 11 : i64} {
  func.func @kernel(%arg0: i32, %arg1: i32, %arg2: memref<3xf32, #tpu.memory_space<smem>>, %arg3: memref<1x1024xf32, #tpu.memory_space<vmem>>, %arg4: memref<1x1024xf32, #tpu.memory_space<vmem>>, %arg5: memref<1x1024xf32, #tpu.memory_space<vmem>>, %arg6: memref<1x1024xf32, #tpu.memory_space<vmem>>) attributes {dimension_semantics = [#tpu.dimension_semantics<parallel>, #tpu.dimension_semantics<parallel>], iteration_bounds = array<i64: 1, 1>, scalar_prefetch = 0 : i64, scratch_operands = 0 : i64, tpu.core_type = #tpu.core_type<tc>, window_params = [{transform_indices = @transform_0, window_bounds = array<i64: 3>}, {transform_indices = @transform_1, window_bounds = array<i64: 1, 1024>}, {transform_indices = @transform_2, window_bounds = array<i64: 1, 1024>}, {transform_indices = @transform_3, window_bounds = array<i64: 1, 1024>}, {transform_indices = @transform_4, window_bounds = array<i64: 1, 1024>}]} {
    %c0 = arith.constant 0 : index
    %c0_0 = arith.constant 0 : index
    %0 = vector.load %arg3[%c0, %c0_0] : memref<1x1024xf32, #tpu.memory_space<vmem>>, vector<1x1024xf32>
    %c0_1 = arith.constant 0 : index
    %1 = memref.load %arg2[%c0_1] : memref<3xf32, #tpu.memory_space<smem>>
    %2 = vector.broadcast %1 : f32 to vector<1x1024xf32>
    %3 = arith.mulf %0, %2 : vector<1x1024xf32>
    %c0_2 = arith.constant 0 : index
    %c0_3 = arith.constant 0 : index
    %4 = vector.load %arg4[%c0_2, %c0_3] : memref<1x1024xf32, #tpu.memory_space<vmem>>, vector<1x1024xf32>
    %c1 = arith.constant 1 : index
    %5 = memref.load %arg2[%c1] : memref<3xf32, #tpu.memory_space<smem>>
    %6 = vector.broadcast %5 : f32 to vector<1x1024xf32>
    %7 = arith.mulf %4, %6 : vector<1x1024xf32>
    %8 = arith.addf %3, %7 : vector<1x1024xf32>
    %c0_4 = arith.constant 0 : index
    %c0_5 = arith.constant 0 : index
    %9 = vector.load %arg5[%c0_4, %c0_5] : memref<1x1024xf32, #tpu.memory_space<vmem>>, vector<1x1024xf32>
    %c2 = arith.constant 2 : index
    %10 = memref.load %arg2[%c2] : memref<3xf32, #tpu.memory_space<smem>>
    %11 = vector.broadcast %10 : f32 to vector<1x1024xf32>
    %12 = arith.mulf %9, %11 : vector<1x1024xf32>
    %13 = arith.addf %8, %12 : vector<1x1024xf32>
    %c0_6 = arith.constant 0 : index
    %c0_7 = arith.constant 0 : index
    %14 = vector.load %arg6[%c0_6, %c0_7] : memref<1x1024xf32, #tpu.memory_space<vmem>>, vector<1x1024xf32>
    tpu.vector_store %arg6[%c0_6, %c0_7], %13 {strides = array<i32>} : memref<1x1024xf32, #tpu.memory_space<vmem>>, vector<1x1024xf32>,
    return
  }
  func.func @transform_0(%arg0: i32, %arg1: i32) -> i32 {
    %c0_i32 = arith.constant 0 : i32
    %c0_i32_0 = arith.constant 0 : i32
    return %c0_i32 : i32
  }
  func.func @transform_1(%arg0: i32, %arg1: i32) -> (i32, i32) {
    %c0_i32 = arith.constant 0 : i32
    return %arg0, %arg1 : i32, i32
  }
  func.func @transform_2(%arg0: i32, %arg1: i32) -> (i32, i32) {
    %c0_i32 = arith.constant 0 : i32
    return %arg0, %arg1 : i32, i32
  }
  func.func @transform_3(%arg0: i32, %arg1: i32) -> (i32, i32) {
    %c0_i32 = arith.constant 0 : i32
    return %arg0, %arg1 : i32, i32
  }
  func.func @transform_4(%arg0: i32, %arg1: i32) -> (i32, i32) {
    %c0_i32 = arith.constant 0 : i32
    return %arg0, %arg1 : i32, i32
  }
}

</mosaic_0001>

<llo_original>
// kernel: tpu_custom_call.1
$region0: #{tpu_custom_call.1}
  #allocation0 [shape = 'u32[]', space=smem, size = 0x4, offset = 0x4, fixed_abs, tag = 'smem constant byte address 0x4 - core index']
  #allocation1 [shape = 'u32[144,128]{1,0:T(1,128)}', space=vmem, size = 0x12000, scoped, tag = 'internal scratch']
  %s0 = inlined_call_operand.hbm [shape: f32[3], index: 0, kind: input, shape index: {}]
  %s1 = inlined_call_operand.hbm [shape: f32[1,1024], index: 1, kind: input, shape index: {}]
  %s2 = inlined_call_operand.hbm [shape: f32[1,1024], index: 2, kind: input, shape index: {}]
  %s3 = inlined_call_operand.vmem [shape: f32[1,1024], index: 3, kind: input, shape index: {}]
  %s4 = inlined_call_operand.hbm [shape: f32[1,1024], index: 4, kind: output, shape index: {}]
  %s5 = sld [smem:[#allocation0]]
  $region38: #{tpu_custom_call.1} parent=0
    _
  %s7 = ssub.s32 1, %s5
  %s8 = scalar_select 0, %s7, %s5
  $region1: #{tpu_custom_call.1} parent=0
    #allocation2 [shape = 'u8[512]{0}', space=smem, size = 0x200, scoped, tag = 'input window, operand 0, single buffered']
    #allocation3 [shape = 's32[1]{0}', space=sflag, size = 0x4, scoped, tag = 'scoped memory for tpu_custom_call.1']
    #allocation4 [shape = 's32[1]{0}', space=sflag, size = 0x4, scoped, tag = 'scoped memory for tpu_custom_call.1']
    #allocation5 [shape = 's32[1]{0}', space=sflag, size = 0x4, scoped, tag = 'scoped memory for tpu_custom_call.1']
    #allocation6 [shape = 'u8[4096]{0}', space=vmem, size = 0x1000, scoped, tag = 'input window, operand 1, single buffered']
    #allocation7 [shape = 'u8[4096]{0}', space=vmem, size = 0x1000, scoped, tag = 'input window, operand 2, single buffered']
    #allocation8 [shape = 's32[1]{0}', space=sflag, size = 0x4, scoped, tag = 'scoped memory for tpu_custom_call.1']
    #allocation9 [shape = 'u8[4096]{0}', space=vmem, size = 0x1000, scoped, tag = 'output window, operand 0, single buffered']
    %9 = vsyncpa [#allocation5], 0
    %10 = vsyncpa [#allocation3], 0
    %11 = vsyncpa [#allocation8], 0
    %12 = vsyncpa [#allocation4], 0
    // Predicated region
    $region2: #{tpu_custom_call.1} parent=1 // pred_check
      _
    $region3: #{tpu_custom_call.1} parent=1 // pred_check_branch
      %14 = sbr.rel (0) target = $region5
    $region4: #{tpu_custom_call.1} parent=1 // pred_region
      %s16 = ssub.s32 16, 16
      %17 = vsyncadd [#allocation5], %s16
      %20 = dma.hbm_to_smem %s0, 16, [#allocation2], [#allocation5]
    $region5: #{tpu_custom_call.1} parent=1 // pred_fallthru
      _
    // Predicated region
    $region6: #{tpu_custom_call.1} parent=1 // pred_check
      _
    $region7: #{tpu_custom_call.1} parent=1 // pred_check_branch
      %22 = sbr.rel (0) target = $region9
    $region8: #{tpu_custom_call.1} parent=1 // pred_region
      %s24 = ssub.s32 128, 128
      %25 = vsyncadd [#allocation3], %s24
      %s27 = sshll.u32 [#allocation6], 4
      %s28 = int_to_ptr.vmem [resolvable:$true] %s27
      %30 = dma.hbm_to_vmem [thread:$0]  %s1, 128, %s28, [#allocation3]
    $region9: #{tpu_custom_call.1} parent=1 // pred_fallthru
      _
    // Predicated region
    $region10: #{tpu_custom_call.1} parent=1 // pred_check
      _
    $region11: #{tpu_custom_call.1} parent=1 // pred_check_branch
      %32 = sbr.rel (0) target = $region13
    $region12: #{tpu_custom_call.1} parent=1 // pred_region
      %s34 = ssub.s32 128, 128
      %35 = vsyncadd [#allocation8], %s34
      %s37 = sshll.u32 [#allocation7], 4
      %s38 = int_to_ptr.vmem [resolvable:$true] %s37
      %40 = dma.hbm_to_vmem [thread:$0]  %s2, 128, %s38, [#allocation8]
    $region13: #{tpu_custom_call.1} parent=1 // pred_fallthru
      _
    // Predicated region
    $region14: #{tpu_custom_call.1} parent=1 // pred_check
      _
    $region15: #{tpu_custom_call.1} parent=1 // pred_check_branch
      %42 = sbr.rel (0) target = $region17
    $region16: #{tpu_custom_call.1} parent=1 // pred_region
      _
    $region17: #{tpu_custom_call.1} parent=1 // pred_fallthru
      _
    // Predicated region
    $region18: #{tpu_custom_call.1} parent=1 // pred_check
      _
    $region19: #{tpu_custom_call.1} parent=1 // pred_check_branch
      %44 = sbr.rel (0) target = $region21
    $region20: #{tpu_custom_call.1} parent=1 // pred_region
      %45 = dma.done [#allocation5], 16
    $region21: #{tpu_custom_call.1} parent=1 // pred_fallthru
      _
    // Predicated region
    $region22: #{tpu_custom_call.1} parent=1 // pred_check
      _
    $region23: #{tpu_custom_call.1} parent=1 // pred_check_branch
      %47 = sbr.rel (0) target = $region25
    $region24: #{tpu_custom_call.1} parent=1 // pred_region
      %48 = dma.done [#allocation3], 128
    $region25: #{tpu_custom_call.1} parent=1 // pred_fallthru
      _
    // Predicated region
    $region26: #{tpu_custom_call.1} parent=1 // pred_check
      _
    $region27: #{tpu_custom_call.1} parent=1 // pred_check_branch
      %50 = sbr.rel (0) target = $region29
    $region28: #{tpu_custom_call.1} parent=1 // pred_region
      %51 = dma.done [#allocation8], 128
    $region29: #{tpu_custom_call.1} parent=1 // pred_fallthru
      _
    %52 = sfence
    %v53 = vld [vmem:[#allocation6] sm:$0xff]
    %s54 = sld [smem:[#allocation2]]
    %v55 = vstv %s54
    %v56 = vmul.f32 %v53, %v55
    %v57 = vld [vmem:[#allocation7] sm:$0xff]
    %s58 = sld [smem:[#allocation2 + $0x1]]
    %v59 = vstv %s58
    %v60 = vmul.f32 %v57, %v59
    %v61 = vadd.f32 %v56, %v60
    %v62 = vld [vmem:[%s3] sm:$0xff]
    %s63 = sld [smem:[#allocation2 + $0x2]]
    %v64 = vstv %s63
    %v65 = vmul.f32 %v62, %v64
    %v66 = vadd.f32 %v61, %v65
    %67 = vst [vmem:[#allocation9] sm:$0xff] %v66
    // Predicated region
    $region30: #{tpu_custom_call.1} parent=1 // pred_check
      _
    $region31: #{tpu_custom_call.1} parent=1 // pred_check_branch
      %69 = sbr.rel (0) target = $region33
    $region32: #{tpu_custom_call.1} parent=1 // pred_region
      %s71 = ssub.s32 128, 128
      %72 = vsyncadd [#allocation4], %s71
      %s74 = sshll.u32 [#allocation9], 4
      %s75 = int_to_ptr.vmem [resolvable:$true] %s74
      %77 = dma.vmem_to_hbm [thread:$0]  %s75, 128, %s4, [#allocation4]
    $region33: #{tpu_custom_call.1} parent=1 // pred_fallthru
      _
    // Predicated region
    $region34: #{tpu_custom_call.1} parent=1 // pred_check
      _
    $region35: #{tpu_custom_call.1} parent=1 // pred_check_branch
      %79 = sbr.rel (0) target = $region37
    $region36: #{tpu_custom_call.1} parent=1 // pred_region
      %80 = dma.done [#allocation4], 128
    $region37: #{tpu_custom_call.1} parent=1 // pred_fallthru
      _
    %81 = vsyncpa [#allocation3], 1
    %82 = vsyncpa [#allocation8], 1
    %83 = vsyncpa [#allocation4], 1
    %84 = vsyncpa [#allocation5], 1

</llo_original>
